<compile_context>
chip_gen: v6e
topology: v6e:2x2x1
jax: 0.10.0
libtpu: 0.0.40
codegen_flags: <defaults>
</compile_context>

<pallas_src>
import jax
import jax.numpy as jnp
from jax.experimental import pallas as pl
from jax.experimental.pallas import tpu as pltpu

IN_FEATURES = 4
OUT_FEATURES = 5


def _linear_add_relu_kernel(x_sref, wt_ref, badd_ref, o_ref):
    # x_sref:   (B, IN)   SMEM  -- read scalar-by-scalar (B == 1 for this module)
    # wt_ref:   (IN, OUT) VMEM  -- weight pre-transposed once at init time
    # badd_ref: (B, OUT)  VMEM  -- bias + add_tensor, folded once at prep time
    wt = wt_ref[...]                 # (IN, OUT), single vreg-load
    y = badd_ref[...]                # (B, OUT)
    # Unrolled K=IN_FEATURES scalar*row FMA chain on the VPU.  The scalar
    # comes from SMEM (scalar-path splat, no XLU lane broadcast); a 1x4x5
    # matmul would waste a full MXU pass + result-FIFO pop for ~40 FLOPs.
    for k in range(IN_FEATURES):
        y = y + x_sref[0, k] * wt[k:k + 1, :]
    o_ref[...] = jnp.maximum(y, 0.0).astype(o_ref.dtype)


def prepare_params(w, b, add_tensor, batch):
    """One-time parameter prep (init time, NOT per forward call).

    Returns (w_t, b_plus_add):
      w_t:        (IN, OUT)  weight pre-transposed once
      b_plus_add: (B, OUT)   bias folded into the additive tensor
    """
    out_f, in_f = w.shape
    w_t = jnp.asarray(w.T)  # (IN, OUT)
    add = jnp.asarray(add_tensor)
    # Explicit broadcast/shape validation (PyTorch-style broadcast to (B, OUT)).
    add2 = jnp.broadcast_to(add, (batch, out_f)) if add.ndim > 0 else jnp.full(
        (batch, out_f), add)
    b_plus_add = b.reshape(1, out_f) + add2  # (B, OUT)
    return w_t, b_plus_add


def linear_add_relu(x, w_t, b_plus_add):
    """relu(x @ W^T + b + add_tensor) fused in one gridless Pallas kernel.

    x:          (B, IN)   float32, B == 1 (module spec: x1 = randn(1, 4))
    w_t:        (IN, OUT) float32, pre-transposed weight
    b_plus_add: (B, OUT)  float32, bias + add_tensor folded at prep time
    """
    B, in_f = x.shape
    out_f = w_t.shape[1]
    assert in_f == IN_FEATURES and w_t.shape == (in_f, out_f)
    # Scalar-from-SMEM path reads row 0 only; the module fixes B == 1.
    assert B == 1, "this fused kernel is specialized for the module's (1, 4) input"
    assert b_plus_add.shape == (B, out_f)

    cost = pl.CostEstimate(
        flops=2 * B * in_f * out_f,
        transcendentals=0,
        bytes_accessed=4 * (B * in_f + in_f * out_f + B * out_f + B * out_f),
    )

    smem = pl.BlockSpec(memory_space=pltpu.MemorySpace.SMEM)
    vmem = pl.BlockSpec(memory_space=pltpu.MemorySpace.VMEM)
    # TODO(synk): if this layer is ever scaled up (large B / OUT), switch to a
    # grid over B with (TB, OUT) blocks, OUT padded to a multiple of 128, and
    # dimension_semantics=("parallel",) so v7x's 2 TensorCores are used.
    return pl.pallas_call(
        _linear_add_relu_kernel,
        out_shape=jax.ShapeDtypeStruct((B, out_f), jnp.float32),
        in_specs=[smem, vmem, vmem],
        out_specs=vmem,
        cost_estimate=cost,
    )(x, w_t, b_plus_add)


def reference(x, w, b, add_tensor):
    return jnp.maximum(x @ w.T + b + add_tensor, 0.0)


if __name__ == "__main__":
    key = jax.random.PRNGKey(0)
    k_x, k_w, k_b, k_add = jax.random.split(key, 4)

    # Shapes implied by the module: Linear(4, 5), x1 = randn(1, 4)
    x = jax.random.normal(k_x, (1, IN_FEATURES), dtype=jnp.float32)
    bound = 1.0 / (IN_FEATURES ** 0.5)
    w = jax.random.uniform(k_w, (OUT_FEATURES, IN_FEATURES),
                           minval=-bound, maxval=bound, dtype=jnp.float32)
    b = jax.random.uniform(k_b, (OUT_FEATURES,),
                           minval=-bound, maxval=bound, dtype=jnp.float32)
    # The __add_tensor_name__ argument: broadcastable to (1, 5)
    add_tensor = jax.random.normal(k_add, (1, OUT_FEATURES), dtype=jnp.float32)

    # One-time prep: pre-transpose the weight and fold bias into the add tensor.
    w_t, b_plus_add = prepare_params(w, b, add_tensor, batch=x.shape[0])

    out = jax.block_until_ready(linear_add_relu(x, w_t, b_plus_add))

    ref = reference(x, w, b, add_tensor)
    assert out.shape == (1, OUT_FEATURES)
    assert jnp.allclose(out, ref, atol=1e-5, rtol=1e-5)
    print("KERNEL_OK")
</pallas_src>

<mosaic_0001>
module attributes {stable_mosaic.version = 11 : i64} {
  func.func @_linear_add_relu_kernel(%arg0: memref<1x4xf32, #tpu.memory_space<smem>>, %arg1: memref<4x5xf32, #tpu.memory_space<vmem>>, %arg2: memref<1x5xf32, #tpu.memory_space<vmem>>, %arg3: memref<1x5xf32, #tpu.memory_space<vmem>>) attributes {dimension_semantics = [], scalar_prefetch = 0 : i64, scratch_operands = 0 : i64, tpu.core_type = #tpu.core_type<tc>} {
    %c0 = arith.constant 0 : index
    %c0_0 = arith.constant 0 : index
    %0 = vector.load %arg1[%c0, %c0_0] : memref<4x5xf32, #tpu.memory_space<vmem>>, vector<4x5xf32>
    %c0_1 = arith.constant 0 : index
    %c0_2 = arith.constant 0 : index
    %1 = vector.load %arg2[%c0_1, %c0_2] : memref<1x5xf32, #tpu.memory_space<vmem>>, vector<1x5xf32>
    %c0_3 = arith.constant 0 : index
    %c0_4 = arith.constant 0 : index
    %2 = memref.load %arg0[%c0_3, %c0_4] : memref<1x4xf32, #tpu.memory_space<smem>>
    %3 = vector.extract_strided_slice %0 {offsets = [0, 0], sizes = [1, 5], strides = [1, 1]} : vector<4x5xf32> to vector<1x5xf32>
    %4 = vector.broadcast %2 : f32 to vector<1x5xf32>
    %5 = arith.mulf %4, %3 : vector<1x5xf32>
    %6 = arith.addf %1, %5 : vector<1x5xf32>
    %c0_5 = arith.constant 0 : index
    %c1 = arith.constant 1 : index
    %7 = memref.load %arg0[%c0_5, %c1] : memref<1x4xf32, #tpu.memory_space<smem>>
    %8 = vector.extract_strided_slice %0 {offsets = [1, 0], sizes = [1, 5], strides = [1, 1]} : vector<4x5xf32> to vector<1x5xf32>
    %9 = vector.broadcast %7 : f32 to vector<1x5xf32>
    %10 = arith.mulf %9, %8 : vector<1x5xf32>
    %11 = arith.addf %6, %10 : vector<1x5xf32>
    %c0_6 = arith.constant 0 : index
    %c2 = arith.constant 2 : index
    %12 = memref.load %arg0[%c0_6, %c2] : memref<1x4xf32, #tpu.memory_space<smem>>
    %13 = vector.extract_strided_slice %0 {offsets = [2, 0], sizes = [1, 5], strides = [1, 1]} : vector<4x5xf32> to vector<1x5xf32>
    %14 = vector.broadcast %12 : f32 to vector<1x5xf32>
    %15 = arith.mulf %14, %13 : vector<1x5xf32>
    %16 = arith.addf %11, %15 : vector<1x5xf32>
    %c0_7 = arith.constant 0 : index
    %c3 = arith.constant 3 : index
    %17 = memref.load %arg0[%c0_7, %c3] : memref<1x4xf32, #tpu.memory_space<smem>>
    %18 = vector.extract_strided_slice %0 {offsets = [3, 0], sizes = [1, 5], strides = [1, 1]} : vector<4x5xf32> to vector<1x5xf32>
    %19 = vector.broadcast %17 : f32 to vector<1x5xf32>
    %20 = arith.mulf %19, %18 : vector<1x5xf32>
    %21 = arith.addf %16, %20 : vector<1x5xf32>
    %cst = arith.constant 0.000000e+00 : f32
    %22 = vector.broadcast %cst : f32 to vector<1x5xf32>
    %23 = arith.maximumf %21, %22 : vector<1x5xf32>
    %c0_8 = arith.constant 0 : index
    %c0_9 = arith.constant 0 : index
    %24 = vector.load %arg3[%c0_8, %c0_9] : memref<1x5xf32, #tpu.memory_space<vmem>>, vector<1x5xf32>
    tpu.vector_store %arg3[%c0_8, %c0_9], %23 {strides = array<i32>} : memref<1x5xf32, #tpu.memory_space<vmem>>, vector<1x5xf32>,
    return
  }
}

</mosaic_0001>

<llo_original>
// kernel: tpu_custom_call.1
$region0: #{tpu_custom_call.1}
  #allocation0 [shape = 'u32[]', space=smem, size = 0x4, offset = 0x4, fixed_abs, tag = 'smem constant byte address 0x4 - core index']
  #allocation1 [shape = 'u32[144,128]{1,0:T(1,128)}', space=vmem, size = 0x12000, scoped, tag = 'internal scratch']
  %s0 = inlined_call_operand.hbm [shape: f32[1,4], index: 0, kind: input, shape index: {}]
  %s1 = inlined_call_operand.hbm [shape: f32[4,5], index: 1, kind: input, shape index: {}]
  %s2 = inlined_call_operand.vmem [shape: f32[1,5], index: 2, kind: input, shape index: {}]
  %s3 = inlined_call_operand.hbm [shape: f32[1,5], index: 3, kind: output, shape index: {}]
  %s4 = sld [smem:[#allocation0]]
  $region30: #{tpu_custom_call.1} parent=0
    _
  %s6 = ssub.s32 1, %s4
  %s7 = scalar_select 0, %s6, %s4
  $region1: #{tpu_custom_call.1} parent=0
    #allocation2 [shape = 'u8[512]{0}', space=smem, size = 0x200, scoped, tag = 'input window, operand 0, single buffered']
    #allocation3 [shape = 's32[1]{0}', space=sflag, size = 0x4, scoped, tag = 'scoped memory for tpu_custom_call.1']
    #allocation4 [shape = 's32[1]{0}', space=sflag, size = 0x4, scoped, tag = 'scoped memory for tpu_custom_call.1']
    #allocation5 [shape = 's32[1]{0}', space=sflag, size = 0x4, scoped, tag = 'scoped memory for tpu_custom_call.1']
    #allocation6 [shape = 'u8[2048]{0}', space=vmem, size = 0x800, scoped, tag = 'input window, operand 1, single buffered']
    #allocation7 [shape = 'u8[512]{0}', space=vmem, size = 0x400, scoped, tag = 'output window, operand 0, single buffered']
    %8 = vsyncpa [#allocation5], 0
    %9 = vsyncpa [#allocation3], 0
    %10 = vsyncpa [#allocation4], 0
    // Predicated region
    $region2: #{tpu_custom_call.1} parent=1 // pred_check
      _
    $region3: #{tpu_custom_call.1} parent=1 // pred_check_branch
      %12 = sbr.rel (0) target = $region5
    $region4: #{tpu_custom_call.1} parent=1 // pred_region
      %s14 = ssub.s32 16, 16
      %15 = vsyncadd [#allocation5], %s14
      %18 = dma.hbm_to_smem %s0, 16, [#allocation2], [#allocation5]
    $region5: #{tpu_custom_call.1} parent=1 // pred_fallthru
      _
    // Predicated region
    $region6: #{tpu_custom_call.1} parent=1 // pred_check
      _
    $region7: #{tpu_custom_call.1} parent=1 // pred_check_branch
      %20 = sbr.rel (0) target = $region9
    $region8: #{tpu_custom_call.1} parent=1 // pred_region
      %s22 = ssub.s32 64, 64
      %23 = vsyncadd [#allocation3], %s22
      %s25 = sshll.u32 [#allocation6], 4
      %s26 = int_to_ptr.vmem [resolvable:$true] %s25
      %28 = dma.hbm_to_vmem [thread:$0]  %s1, 64, %s26, [#allocation3]
    $region9: #{tpu_custom_call.1} parent=1 // pred_fallthru
      _
    // Predicated region
    $region10: #{tpu_custom_call.1} parent=1 // pred_check
      _
    $region11: #{tpu_custom_call.1} parent=1 // pred_check_branch
      %30 = sbr.rel (0) target = $region13
    $region12: #{tpu_custom_call.1} parent=1 // pred_region
      _
    $region13: #{tpu_custom_call.1} parent=1 // pred_fallthru
      _
    // Predicated region
    $region14: #{tpu_custom_call.1} parent=1 // pred_check
      _
    $region15: #{tpu_custom_call.1} parent=1 // pred_check_branch
      %32 = sbr.rel (0) target = $region17
    $region16: #{tpu_custom_call.1} parent=1 // pred_region
      %33 = dma.done [#allocation5], 16
    $region17: #{tpu_custom_call.1} parent=1 // pred_fallthru
      _
    // Predicated region
    $region18: #{tpu_custom_call.1} parent=1 // pred_check
      _
    $region19: #{tpu_custom_call.1} parent=1 // pred_check_branch
      %35 = sbr.rel (0) target = $region21
    $region20: #{tpu_custom_call.1} parent=1 // pred_region
      %36 = dma.done [#allocation3], 64
    $region21: #{tpu_custom_call.1} parent=1 // pred_fallthru
      _
    %37 = sfence
    %v38 = vld [vmem:[#allocation6] sm:$0xf]
    %v39 = vld [vmem:[%s2] sm:$0x1]
    %s40 = sld [smem:[#allocation2]]
    %v41 = vstv %s40
    %v42 = vmul.f32 %v41, %v38
    %v43 = vadd.f32 %v39, %v42
    %s44 = sld [smem:[#allocation2 + $0x1]]
    %v45 = vstv %s44
    %v46 = vmul.f32 %v45, %v38
    %v49 = vunpack.c.l.s4 1966171168
    %v50 = vunpack.c.0.s8 %v49
    %v51 = vlaneseq
    %v52 = vshrl.u32 %v51, 7
    %v53 = vsub.s32 %v50, %v52
    %v54 = vrot.slane %v46, %v53
    %v55 = vcombine.high %v54, %v54
    %v57 = vunpack.c.l.s4 1966171168
    %v58 = vunpack.c.0.s8 %v57
    %v59 = vlaneseq
    %v60 = vshrl.u32 %v59, 7
    %v61 = vsub.s32 %v58, %v60
    %v62 = vrot.slane %v55, %v61
    %v64 = vadd.f32 %v43, %v62
    %s65 = sld [smem:[#allocation2 + $0x2]]
    %v66 = vstv %s65
    %v67 = vmul.f32 %v66, %v38
    %v70 = vunpack.c.l.s4 1966171168
    %v71 = vunpack.c.0.s8 %v70
    %v72 = vlaneseq
    %v73 = vshrl.u32 %v72, 7
    %v74 = vsub.s32 %v71, %v73
    %v75 = vrot.slane %v67, %v74
    %v77 = vunpack.c.l.s4 1966171168
    %v78 = vunpack.c.0.s8 %v77
    %v79 = vlaneseq
    %v80 = vshrl.u32 %v79, 7
    %v81 = vsub.s32 %v78, %v80
    %v82 = vrot.slane %v75, %v81
    %v83 = vcombine.high %v82, %v82
    %v85 = vadd.f32 %v64, %v83
    %s86 = sld [smem:[#allocation2 + $0x3]]
    %v87 = vstv %s86
    %v88 = vmul.f32 %v87, %v38
    %v91 = vunpack.c.l.s4 1966171168
    %v92 = vunpack.c.0.s8 %v91
    %v93 = vlaneseq
    %v94 = vshrl.u32 %v93, 7
    %v95 = vsub.s32 %v92, %v94
    %v96 = vrot.slane %v88, %v95
    %v97 = vcombine.high %v96, %v96
    %v99 = vunpack.c.l.s4 1966171168
    %v100 = vunpack.c.0.s8 %v99
    %v101 = vlaneseq
    %v102 = vshrl.u32 %v101, 7
    %v103 = vsub.s32 %v100, %v102
    %v104 = vrot.slane %v97, %v103
    %v105 = vcombine.high %v104, %v104
    %v107 = vadd.f32 %v85, %v105
    %v108 = vmax.f32 %v107, 0.0
    %vm109 = vcmask 32768
    %110 = vst.msk [vmem:[#allocation7] sm:$0x1] %vm109, %v108
    // Predicated region
    $region22: #{tpu_custom_call.1} parent=1 // pred_check
      _
    $region23: #{tpu_custom_call.1} parent=1 // pred_check_branch
      %112 = sbr.rel (0) target = $region25
    $region24: #{tpu_custom_call.1} parent=1 // pred_region
      %s114 = ssub.s32 16, 16
      %115 = vsyncadd [#allocation4], %s114
      %s117 = sshll.u32 [#allocation7], 4
      %s118 = int_to_ptr.vmem [resolvable:$true] %s117
      %120 = dma.vmem_to_hbm [thread:$0]  %s118, 16, %s3, [#allocation4]
    $region25: #{tpu_custom_call.1} parent=1 // pred_fallthru
      _
    // Predicated region
    $region26: #{tpu_custom_call.1} parent=1 // pred_check
      _
    $region27: #{tpu_custom_call.1} parent=1 // pred_check_branch
      %122 = sbr.rel (0) target = $region29
    $region28: #{tpu_custom_call.1} parent=1 // pred_region
      %123 = dma.done [#allocation4], 16
    $region29: #{tpu_custom_call.1} parent=1 // pred_fallthru
      _
    %124 = vsyncpa [#allocation3], 1
    %125 = vsyncpa [#allocation4], 1
    %126 = vsyncpa [#allocation5], 1

</llo_original>
